<compile_context>
chip_gen: v7x
topology: tpu7x:2x2x1
jax: 0.10.0
libtpu: 0.0.40
codegen_flags: <defaults>
</compile_context>

<pallas_src>
import jax
import jax.numpy as jnp
from jax.experimental import pallas as pl
from jax.experimental.pallas import tpu as pltpu


def _linear_kernel(x_ref, w_ref, b_ref, o_ref):
    # x_ref: (M, Kp) f32, w_ref: (Kp, E) bf16, b_ref: (1, E) f32,
    # o_ref: (M, E).  Cast x in VMEM (VPU-cheap), matmul on the bf16 MXU path
    # with f32 accumulation, single bias-add epilogue.
    xb = x_ref[...].astype(jnp.bfloat16)
    acc = jnp.dot(xb, w_ref[...], preferred_element_type=jnp.float32)
    o_ref[...] = (acc + b_ref[...]).astype(o_ref.dtype)


def prepare_params(weight, bias, *, k_pad_to=128):
    """One-time param prep (call at init, NOT per forward).

    weight: (E, L) PyTorch nn.Linear layout -> (Kp, E) bf16, pre-transposed and
            zero-padded along the contraction dim to a multiple of `k_pad_to`.
    bias:   (E,) -> (1, E) f32.
    """
    weight = jnp.asarray(weight)
    E, L = weight.shape
    Lp = ((L + k_pad_to - 1) // k_pad_to) * k_pad_to
    wt = weight.T.astype(jnp.bfloat16)                         # (L, E)
    if Lp != L:
        wt = jnp.pad(wt, ((0, Lp - L), (0, 0)))                # (Lp, E), zeros
    b2 = jnp.asarray(bias, dtype=jnp.float32).reshape(1, -1)   # (1, E)
    return wt, b2


def histogram_embed(x, wt, bias2, *, out_dtype=None):
    """Forward pass: y = x @ W^T + b  (semantics of nn.Linear(L, E)).

    x:     (B, H, L) float32
    wt:    (Lp, E)   bfloat16, Lp >= L zero-padded (from prepare_params)
    bias2: (1, E)    float32 (from prepare_params)
    out_dtype: output dtype (default: x.dtype, i.e. f32 parity with nn.Linear;
               pass jnp.bfloat16 to halve the output writeback).
    """
    B, H, L = x.shape
    Lp, E = wt.shape
    assert Lp >= L, "padded contraction dim smaller than histogram_length"
    assert Lp % 128 == 0 and E % 128 == 0, "keep lanes dense (multiples of 128)"
    out_dtype = x.dtype if out_dtype is None else out_dtype

    M = B * H
    x2 = x.reshape(M, L)                     # free reshape (collapse leading dims)
    if Lp != L:
        x2 = jnp.pad(x2, ((0, 0), (0, Lp - L)))   # zero-pad K; exact for the dot

    flops = 2 * M * Lp * E
    bytes_accessed = (M * Lp * 4) + (Lp * E * 2) + (E * 4) + (M * E * out_dtype.dtype.itemsize
                                                              if hasattr(out_dtype, "dtype")
                                                              else M * E * jnp.dtype(out_dtype).itemsize)

    out2 = pl.pallas_call(
        _linear_kernel,
        out_shape=jax.ShapeDtypeStruct((M, E), out_dtype),
        # No grid: single invocation, whole arrays resident in VMEM
        # (~0.6 MB << VMEM on v5e/v6e/v7x; no vmem_limit_bytes needed).
        in_specs=[
            pl.BlockSpec(memory_space=pltpu.MemorySpace.VMEM),  # x  (M, Lp) f32
            pl.BlockSpec(memory_space=pltpu.MemorySpace.VMEM),  # wt (Lp, E) bf16
            pl.BlockSpec(memory_space=pltpu.MemorySpace.VMEM),  # b  (1, E)  f32
        ],
        out_specs=pl.BlockSpec(memory_space=pltpu.MemorySpace.VMEM),
        cost_estimate=pl.CostEstimate(
            flops=flops, transcendentals=0, bytes_accessed=bytes_accessed
        ),
    )(x2, wt, bias2)

    return out2.reshape(B, H, E)


def init_params(key, histogram_length, embed_dim, dtype=jnp.float32):
    """Deterministic nn.Linear-style init: U(-1/sqrt(fan_in), 1/sqrt(fan_in))."""
    kw, kb = jax.random.split(key)
    bound = 1.0 / (histogram_length ** 0.5)
    weight = jax.random.uniform(
        kw, (embed_dim, histogram_length), dtype=dtype, minval=-bound, maxval=bound
    )
    bias = jax.random.uniform(
        kb, (embed_dim,), dtype=dtype, minval=-bound, maxval=bound
    )
    return weight, bias


if __name__ == "__main__":
    # Module defaults: histogram_num=16, histogram_length=300, embed_dim=768
    B, histogram_num, histogram_length, embed_dim = 2, 16, 300, 768

    key = jax.random.PRNGKey(0)
    kx, kp = jax.random.split(key)

    x = jax.random.normal(kx, (B, histogram_num, histogram_length), dtype=jnp.float32)
    weight, bias = init_params(kp, histogram_length, embed_dim)

    # One-time param prep (transpose + bf16 cast + K-pad hoisted out of the call path).
    wt, b2 = prepare_params(weight, bias)

    out = histogram_embed(x, wt, b2)
    out = jax.block_until_ready(out)
    assert out.shape == (B, histogram_num, embed_dim)

    # Matched-precision reference (bf16 inputs, f32 accumulation) -> tight check.
    M = B * histogram_num
    x2p = jnp.pad(x.reshape(M, histogram_length),
                  ((0, 0), (0, wt.shape[0] - histogram_length))).astype(jnp.bfloat16)
    ref_bf16 = (
        jnp.dot(x2p, wt, preferred_element_type=jnp.float32) + b2
    ).reshape(B, histogram_num, embed_dim)
    assert jnp.allclose(out, ref_bf16, atol=1e-3, rtol=1e-3)

    # Full-f32 reference of the original nn.Linear forward -> bf16-level tolerance.
    ref_f32 = jnp.einsum("bhl,el->bhe", x, weight) + bias
    assert jnp.allclose(out, ref_f32, atol=5e-2, rtol=5e-2)

    print("KERNEL_OK")
</pallas_src>

<mosaic_0001>
module attributes {stable_mosaic.version = 11 : i64} {
  func.func @_linear_kernel(%arg0: memref<32x384xf32, #tpu.memory_space<vmem>>, %arg1: memref<384x768xbf16, #tpu.memory_space<vmem>>, %arg2: memref<1x768xf32, #tpu.memory_space<vmem>>, %arg3: memref<32x768xf32, #tpu.memory_space<vmem>>) attributes {dimension_semantics = [], scalar_prefetch = 0 : i64, scratch_operands = 0 : i64, tpu.core_type = #tpu.core_type<tc>} {
    %c0 = arith.constant 0 : index
    %c0_0 = arith.constant 0 : index
    %0 = vector.load %arg0[%c0, %c0_0] : memref<32x384xf32, #tpu.memory_space<vmem>>, vector<32x384xf32>
    %1 = arith.truncf %0 : vector<32x384xf32> to vector<32x384xbf16>
    %c0_1 = arith.constant 0 : index
    %c0_2 = arith.constant 0 : index
    %2 = vector.load %arg1[%c0_1, %c0_2] : memref<384x768xbf16, #tpu.memory_space<vmem>>, vector<384x768xbf16>
    %cst = arith.constant dense<0.000000e+00> : vector<32x768xf32>
    %3 = tpu.matmul %1, %2, %cst {dimension_numbers = #tpu.dot_dimension_numbers<[1], [0], [0], [1], [0, 0, 1, 1], [], []>} : vector<32x384xbf16>, vector<384x768xbf16>, vector<32x768xf32> -> vector<32x768xf32>
    %c0_3 = arith.constant 0 : index
    %c0_4 = arith.constant 0 : index
    %4 = vector.load %arg2[%c0_3, %c0_4] : memref<1x768xf32, #tpu.memory_space<vmem>>, vector<1x768xf32>
    %5 = vector.broadcast %4 : vector<1x768xf32> to vector<32x768xf32>
    %6 = arith.addf %3, %5 : vector<32x768xf32>
    %c0_5 = arith.constant 0 : index
    %c0_6 = arith.constant 0 : index
    %7 = vector.load %arg3[%c0_5, %c0_6] : memref<32x768xf32, #tpu.memory_space<vmem>>, vector<32x768xf32>
    tpu.vector_store %arg3[%c0_5, %c0_6], %6 {strides = array<i32>} : memref<32x768xf32, #tpu.memory_space<vmem>>, vector<32x768xf32>,
    return
  }
}

</mosaic_0001>

<llo_original>
// kernel: tpu_custom_call.1
$region0: #{tpu_custom_call.1}
  #allocation0 [shape = 'u32[]', space=smem, size = 0x4, offset = 0x4, fixed_abs, tag = 'smem constant byte address 0x4 - core index']
  #allocation1 [shape = 'u32[144,128]{1,0:T(1,128)}', space=vmem, size = 0x12000, scoped, tag = 'internal scratch']
  %s0 = inlined_call_operand.hbm [shape: f32[32,384], index: 0, kind: input, shape index: {}]
  %s1 = inlined_call_operand.hbm [shape: bf16[384,768], index: 1, kind: input, shape index: {}]
  %s2 = inlined_call_operand.vmem [shape: f32[1,768], index: 2, kind: input, shape index: {}]
  %s3 = inlined_call_operand.hbm [shape: f32[32,768], index: 3, kind: output, shape index: {}]
  %s4 = sld [smem:[#allocation0]]
  $region30: #{tpu_custom_call.1} parent=0
    _
  %s6 = ssub.s32 1, %s4
  %s7 = scalar_select 0, %s6, %s4
  $region1: #{tpu_custom_call.1} parent=0
    #allocation2 [shape = 'u8[49152]{0}', space=vmem, size = 0xc000, scoped, tag = 'input window, operand 0, single buffered']
    #allocation3 [shape = 's32[1]{0}', space=sflag, size = 0x4, scoped, tag = 'scoped memory for tpu_custom_call.1']
    #allocation4 [shape = 's32[1]{0}', space=sflag, size = 0x4, scoped, tag = 'scoped memory for tpu_custom_call.1']
    #allocation5 [shape = 'u8[589824]{0}', space=vmem, size = 0x90000, scoped, tag = 'input window, operand 1, single buffered']
    #allocation6 [shape = 's32[1]{0}', space=sflag, size = 0x4, scoped, tag = 'scoped memory for tpu_custom_call.1']
    #allocation7 [shape = 'u8[98304]{0}', space=vmem, size = 0x18000, scoped, tag = 'output window, operand 0, single buffered']
    %8 = vsyncpa [#allocation3], 0
    %9 = vsyncpa [#allocation6], 0
    %10 = vsyncpa [#allocation4], 0
    // Predicated region
    $region2: #{tpu_custom_call.1} parent=1 // pred_check
      _
    $region3: #{tpu_custom_call.1} parent=1 // pred_check_branch
      %12 = sbr.rel (0) target = $region5
    $region4: #{tpu_custom_call.1} parent=1 // pred_region
      %s14 = ssub.s32 1536, 1536
      %15 = vsyncadd [#allocation3], %s14
      %s16 = sshll.u32 [#allocation2], 4
      %s17 = int_to_ptr.vmem [resolvable:$true] %s16
      %22 = dma.hbm_to_vmem [thread:$0]  %s0, 1536, %s17, [#allocation3], 384, 384, 24
    $region5: #{tpu_custom_call.1} parent=1 // pred_fallthru
      _
    // Predicated region
    $region6: #{tpu_custom_call.1} parent=1 // pred_check
      _
    $region7: #{tpu_custom_call.1} parent=1 // pred_check_branch
      %24 = sbr.rel (0) target = $region9
    $region8: #{tpu_custom_call.1} parent=1 // pred_region
      %s26 = ssub.s32 18432, 18432
      %27 = vsyncadd [#allocation6], %s26
      %s28 = sshll.u32 [#allocation5], 4
      %s29 = int_to_ptr.vmem [resolvable:$true] %s28
      %34 = dma.hbm_to_vmem [thread:$0]  %s1, 18432, %s29, [#allocation6], 384, 384, 24
    $region9: #{tpu_custom_call.1} parent=1 // pred_fallthru
      _
    // Predicated region
    $region10: #{tpu_custom_call.1} parent=1 // pred_check
      _
    $region11: #{tpu_custom_call.1} parent=1 // pred_check_branch
      %36 = sbr.rel (0) target = $region13
    $region12: #{tpu_custom_call.1} parent=1 // pred_region
      _
    $region13: #{tpu_custom_call.1} parent=1 // pred_fallthru
      _
    // Predicated region
    $region14: #{tpu_custom_call.1} parent=1 // pred_check
      _
    $region15: #{tpu_custom_call.1} parent=1 // pred_check_branch
      %38 = sbr.rel (0) target = $region17
    $region16: #{tpu_custom_call.1} parent=1 // pred_region
      %39 = dma.done [#allocation3], 1536
    $region17: #{tpu_custom_call.1} parent=1 // pred_fallthru
      _
    // Predicated region
    $region18: #{tpu_custom_call.1} parent=1 // pred_check
      _
    $region19: #{tpu_custom_call.1} parent=1 // pred_check_branch
      %41 = sbr.rel (0) target = $region21
    $region20: #{tpu_custom_call.1} parent=1 // pred_region
      %42 = dma.done [#allocation6], 18432
    $region21: #{tpu_custom_call.1} parent=1 // pred_fallthru
      _
    %v44 = vld [vmem:[#allocation2] sm:$0xff]
    %v45 = vld [vmem:[#allocation2 + $0x8] sm:$0xff]
    %v46 = vld [vmem:[#allocation2 + $0x10] sm:$0xff]
    %v47 = vld [vmem:[#allocation2 + $0x18] sm:$0xff]
    %v48 = vld [vmem:[#allocation2 + $0x20] sm:$0xff]
    %v49 = vld [vmem:[#allocation2 + $0x28] sm:$0xff]
    %v50 = vld [vmem:[#allocation2 + $0x30] sm:$0xff]
    %v51 = vld [vmem:[#allocation2 + $0x38] sm:$0xff]
    %v52 = vld [vmem:[#allocation2 + $0x40] sm:$0xff]
    %v53 = vld [vmem:[#allocation2 + $0x48] sm:$0xff]
    %v54 = vld [vmem:[#allocation2 + $0x50] sm:$0xff]
    %v55 = vld [vmem:[#allocation2 + $0x58] sm:$0xff]
    %v56 = vpack.c.bf16 %v47, %v44
    %v57 = vpack.c.bf16 %v48, %v45
    %v58 = vpack.c.bf16 %v49, %v46
    %v59 = vpack.c.bf16 %v53, %v50
    %v60 = vpack.c.bf16 %v54, %v51
    %v61 = vpack.c.bf16 %v55, %v52
    %v62 = vld [vmem:[#allocation5] sm:$0xff]
    %v63 = vld [vmem:[#allocation5 + $0x8] sm:$0xff]
    %v64 = vld [vmem:[#allocation5 + $0x10] sm:$0xff]
    %v65 = vld [vmem:[#allocation5 + $0x18] sm:$0xff]
    %v66 = vld [vmem:[#allocation5 + $0x20] sm:$0xff]
    %v67 = vld [vmem:[#allocation5 + $0x28] sm:$0xff]
    %v68 = vld [vmem:[#allocation5 + $0x30] sm:$0xff]
    %v69 = vld [vmem:[#allocation5 + $0x38] sm:$0xff]
    %v70 = vld [vmem:[#allocation5 + $0x40] sm:$0xff]
    %v71 = vld [vmem:[#allocation5 + $0x48] sm:$0xff]
    %v72 = vld [vmem:[#allocation5 + $0x50] sm:$0xff]
    %v73 = vld [vmem:[#allocation5 + $0x58] sm:$0xff]
    %v74 = vld [vmem:[#allocation5 + $0x60] sm:$0xff]
    %v75 = vld [vmem:[#allocation5 + $0x68] sm:$0xff]
    %v76 = vld [vmem:[#allocation5 + $0x70] sm:$0xff]
    %v77 = vld [vmem:[#allocation5 + $0x78] sm:$0xff]
    %v78 = vld [vmem:[#allocation5 + $0x80] sm:$0xff]
    %v79 = vld [vmem:[#allocation5 + $0x88] sm:$0xff]
    %v80 = vld [vmem:[#allocation5 + $0x90] sm:$0xff]
    %v81 = vld [vmem:[#allocation5 + $0x98] sm:$0xff]
    %v82 = vld [vmem:[#allocation5 + $0xa0] sm:$0xff]
    %v83 = vld [vmem:[#allocation5 + $0xa8] sm:$0xff]
    %v84 = vld [vmem:[#allocation5 + $0xb0] sm:$0xff]
    %v85 = vld [vmem:[#allocation5 + $0xb8] sm:$0xff]
    %v86 = vld [vmem:[#allocation5 + $0xc0] sm:$0xff]
    %v87 = vld [vmem:[#allocation5 + $0xc8] sm:$0xff]
    %v88 = vld [vmem:[#allocation5 + $0xd0] sm:$0xff]
    %v89 = vld [vmem:[#allocation5 + $0xd8] sm:$0xff]
    %v90 = vld [vmem:[#allocation5 + $0xe0] sm:$0xff]
    %v91 = vld [vmem:[#allocation5 + $0xe8] sm:$0xff]
    %v92 = vld [vmem:[#allocation5 + $0xf0] sm:$0xff]
    %v93 = vld [vmem:[#allocation5 + $0xf8] sm:$0xff]
    %v94 = vld [vmem:[#allocation5 + $0x100] sm:$0xff]
    %v95 = vld [vmem:[#allocation5 + $0x108] sm:$0xff]
    %v96 = vld [vmem:[#allocation5 + $0x110] sm:$0xff]
    %v97 = vld [vmem:[#allocation5 + $0x118] sm:$0xff]
    %v98 = vld [vmem:[#allocation5 + $0x120] sm:$0xff]
    %v99 = vld [vmem:[#allocation5 + $0x128] sm:$0xff]
    %v100 = vld [vmem:[#allocation5 + $0x130] sm:$0xff]
    %v101 = vld [vmem:[#allocation5 + $0x138] sm:$0xff]
    %v102 = vld [vmem:[#allocation5 + $0x140] sm:$0xff]
    %v103 = vld [vmem:[#allocation5 + $0x148] sm:$0xff]
    %v104 = vld [vmem:[#allocation5 + $0x150] sm:$0xff]
    %v105 = vld [vmem:[#allocation5 + $0x158] sm:$0xff]
    %v106 = vld [vmem:[#allocation5 + $0x160] sm:$0xff]
    %v107 = vld [vmem:[#allocation5 + $0x168] sm:$0xff]
    %v108 = vld [vmem:[#allocation5 + $0x170] sm:$0xff]
    %v109 = vld [vmem:[#allocation5 + $0x178] sm:$0xff]
    %v110 = vld [vmem:[#allocation5 + $0x180] sm:$0xff]
    %v111 = vld [vmem:[#allocation5 + $0x188] sm:$0xff]
    %v112 = vld [vmem:[#allocation5 + $0x190] sm:$0xff]
    %v113 = vld [vmem:[#allocation5 + $0x198] sm:$0xff]
    %v114 = vld [vmem:[#allocation5 + $0x1a0] sm:$0xff]
    %v115 = vld [vmem:[#allocation5 + $0x1a8] sm:$0xff]
    %v116 = vld [vmem:[#allocation5 + $0x1b0] sm:$0xff]
    %v117 = vld [vmem:[#allocation5 + $0x1b8] sm:$0xff]
    %v118 = vld [vmem:[#allocation5 + $0x1c0] sm:$0xff]
    %v119 = vld [vmem:[#allocation5 + $0x1c8] sm:$0xff]
    %v120 = vld [vmem:[#allocation5 + $0x1d0] sm:$0xff]
    %v121 = vld [vmem:[#allocation5 + $0x1d8] sm:$0xff]
    %v122 = vld [vmem:[#allocation5 + $0x1e0] sm:$0xff]
    %v123 = vld [vmem:[#allocation5 + $0x1e8] sm:$0xff]
    %v124 = vld [vmem:[#allocation5 + $0x1f0] sm:$0xff]
    %v125 = vld [vmem:[#allocation5 + $0x1f8] sm:$0xff]
    %v126 = vld [vmem:[#allocation5 + $0x200] sm:$0xff]
    %v127 = vld [vmem:[#allocation5 + $0x208] sm:$0xff]
    %v128 = vld [vmem:[#allocation5 + $0x210] sm:$0xff]
    %v129 = vld [vmem:[#allocation5 + $0x218] sm:$0xff]
    %v130 = vld [vmem:[#allocation5 + $0x220] sm:$0xff]
    %v131 = vld [vmem:[#allocation5 + $0x228] sm:$0xff]
    %v132 = vld [vmem:[#allocation5 + $0x230] sm:$0xff]
    %v133 = vld [vmem:[#allocation5 + $0x238] sm:$0xff]
    %v134 = vld [vmem:[#allocation5 + $0x240] sm:$0xff]
    %v135 = vld [vmem:[#allocation5 + $0x248] sm:$0xff]
    %v136 = vld [vmem:[#allocation5 + $0x250] sm:$0xff]
    %v137 = vld [vmem:[#allocation5 + $0x258] sm:$0xff]
    %v138 = vld [vmem:[#allocation5 + $0x260] sm:$0xff]
    %v139 = vld [vmem:[#allocation5 + $0x268] sm:$0xff]
    %v140 = vld [vmem:[#allocation5 + $0x270] sm:$0xff]
    %v141 = vld [vmem:[#allocation5 + $0x278] sm:$0xff]
    %v142 = vld [vmem:[#allocation5 + $0x280] sm:$0xff]
    %v143 = vld [vmem:[#allocation5 + $0x288] sm:$0xff]
    %v144 = vld [vmem:[#allocation5 + $0x290] sm:$0xff]
    %v145 = vld [vmem:[#allocation5 + $0x298] sm:$0xff]
    %v146 = vld [vmem:[#allocation5 + $0x2a0] sm:$0xff]
    %v147 = vld [vmem:[#allocation5 + $0x2a8] sm:$0xff]
    %v148 = vld [vmem:[#allocation5 + $0x2b0] sm:$0xff]
    %v149 = vld [vmem:[#allocation5 + $0x2b8] sm:$0xff]
    %v150 = vld [vmem:[#allocation5 + $0x2c0] sm:$0xff]
    %v151 = vld [vmem:[#allocation5 + $0x2c8] sm:$0xff]
    %v152 = vld [vmem:[#allocation5 + $0x2d0] sm:$0xff]
    %v153 = vld [vmem:[#allocation5 + $0x2d8] sm:$0xff]
    %v154 = vld [vmem:[#allocation5 + $0x2e0] sm:$0xff]
    %v155 = vld [vmem:[#allocation5 + $0x2e8] sm:$0xff]
    %v156 = vld [vmem:[#allocation5 + $0x2f0] sm:$0xff]
    %v157 = vld [vmem:[#allocation5 + $0x2f8] sm:$0xff]
    %v158 = vld [vmem:[#allocation5 + $0x300] sm:$0xff]
    %v159 = vld [vmem:[#allocation5 + $0x308] sm:$0xff]
    %v160 = vld [vmem:[#allocation5 + $0x310] sm:$0xff]
    %v161 = vld [vmem:[#allocation5 + $0x318] sm:$0xff]
    %v162 = vld [vmem:[#allocation5 + $0x320] sm:$0xff]
    %v163 = vld [vmem:[#allocation5 + $0x328] sm:$0xff]
    %v164 = vld [vmem:[#allocation5 + $0x330] sm:$0xff]
    %v165 = vld [vmem:[#allocation5 + $0x338] sm:$0xff]
    %v166 = vld [vmem:[#allocation5 + $0x340] sm:$0xff]
    %v167 = vld [vmem:[#allocation5 + $0x348] sm:$0xff]
    %v168 = vld [vmem:[#allocation5 + $0x350] sm:$0xff]
    %v169 = vld [vmem:[#allocation5 + $0x358] sm:$0xff]
    %v170 = vld [vmem:[#allocation5 + $0x360] sm:$0xff]
    %v171 = vld [vmem:[#allocation5 + $0x368] sm:$0xff]
    %v172 = vld [vmem:[#allocation5 + $0x370] sm:$0xff]
    %v173 = vld [vmem:[#allocation5 + $0x378] sm:$0xff]
    %v174 = vld [vmem:[#allocation5 + $0x380] sm:$0xff]
    %v175 = vld [vmem:[#allocation5 + $0x388] sm:$0xff]
    %v176 = vld [vmem:[#allocation5 + $0x390] sm:$0xff]
    %v177 = vld [vmem:[#allocation5 + $0x398] sm:$0xff]
    %v178 = vld [vmem:[#allocation5 + $0x3a0] sm:$0xff]
    %v179 = vld [vmem:[#allocation5 + $0x3a8] sm:$0xff]
    %v180 = vld [vmem:[#allocation5 + $0x3b0] sm:$0xff]
    %v181 = vld [vmem:[#allocation5 + $0x3b8] sm:$0xff]
    %v182 = vld [vmem:[#allocation5 + $0x3c0] sm:$0xff]
    %v183 = vld [vmem:[#allocation5 + $0x3c8] sm:$0xff]
    %v184 = vld [vmem:[#allocation5 + $0x3d0] sm:$0xff]
    %v185 = vld [vmem:[#allocation5 + $0x3d8] sm:$0xff]
    %v186 = vld [vmem:[#allocation5 + $0x3e0] sm:$0xff]
    %v187 = vld [vmem:[#allocation5 + $0x3e8] sm:$0xff]
    %v188 = vld [vmem:[#allocation5 + $0x3f0] sm:$0xff]
    %v189 = vld [vmem:[#allocation5 + $0x3f8] sm:$0xff]
    %v190 = vld [vmem:[#allocation5 + $0x400] sm:$0xff]
    %v191 = vld [vmem:[#allocation5 + $0x408] sm:$0xff]
    %v192 = vld [vmem:[#allocation5 + $0x410] sm:$0xff]
    %v193 = vld [vmem:[#allocation5 + $0x418] sm:$0xff]
    %v194 = vld [vmem:[#allocation5 + $0x420] sm:$0xff]
    %v195 = vld [vmem:[#allocation5 + $0x428] sm:$0xff]
    %v196 = vld [vmem:[#allocation5 + $0x430] sm:$0xff]
    %v197 = vld [vmem:[#allocation5 + $0x438] sm:$0xff]
    %v198 = vld [vmem:[#allocation5 + $0x440] sm:$0xff]
    %v199 = vld [vmem:[#allocation5 + $0x448] sm:$0xff]
    %v200 = vld [vmem:[#allocation5 + $0x450] sm:$0xff]
    %v201 = vld [vmem:[#allocation5 + $0x458] sm:$0xff]
    %v202 = vld [vmem:[#allocation5 + $0x460] sm:$0xff]
    %v203 = vld [vmem:[#allocation5 + $0x468] sm:$0xff]
    %v204 = vld [vmem:[#allocation5 + $0x470] sm:$0xff]
    %v205 = vld [vmem:[#allocation5 + $0x478] sm:$0xff]
    %v206 = vld [vmem:[%s2] sm:$0x3f]
    %v208 = vlaneseq
    %v209 = vshrl.u32 %v208, 7
    %v210 = vsub.s32 0, %v209
    %v211 = vrot.slane %v206, %v210
    %v212 = vlaneseq
    %v213 = vshrl.u32 %v212, 7
    %v214 = vsub.s32 1, %v213
    %v215 = vrot.slane %v206, %v214
    %v216 = vlaneseq
    %v217 = vshrl.u32 %v216, 7
    %v218 = vsub.s32 2, %v217
    %v219 = vrot.slane %v206, %v218
    %v220 = vlaneseq
    %v221 = vshrl.u32 %v220, 7
    %v222 = vsub.s32 3, %v221
    %v223 = vrot.slane %v206, %v222
    %v224 = vlaneseq
    %v225 = vshrl.u32 %v224, 7
    %v226 = vsub.s32 4, %v225
    %v227 = vrot.slane %v206, %v226
    %v228 = vlaneseq
    %v229 = vshrl.u32 %v228, 7
    %v230 = vsub.s32 5, %v229
    %v231 = vrot.slane %v206, %v230
    %v382 = vunpack.c.l.b16 %v62
    %v383 = vunpack.c.h.b16 %v62
    %v384 = vunpack.c.l.b16 %v63
    %v385 = vunpack.c.h.b16 %v63
    %v386 = vunpack.c.l.b16 %v64
    %v387 = vunpack.c.h.b16 %v64
    %v388 = vunpack.c.l.b16 %v65
    %v389 = vunpack.c.h.b16 %v65
    %v390 = vunpack.c.l.b16 %v66
    %v391 = vunpack.c.h.b16 %v66
    %v392 = vunpack.c.l.b16 %v67
    %v393 = vunpack.c.h.b16 %v67
    %v394 = vunpack.c.l.b16 %v68
    %v395 = vunpack.c.h.b16 %v68
    %v396 = vunpack.c.l.b16 %v69
    %v397 = vunpack.c.h.b16 %v69
    %v398 = vunpack.c.l.b16 %v70
    %v399 = vunpack.c.h.b16 %v70
    %v400 = vunpack.c.l.b16 %v71
    %v401 = vunpack.c.h.b16 %v71
    %v402 = vunpack.c.l.b16 %v72
    %v403 = vunpack.c.h.b16 %v72
    %v404 = vunpack.c.l.b16 %v73
    %v405 = vunpack.c.h.b16 %v73
    %v406 = vunpack.c.l.b16 %v74
    %v407 = vunpack.c.h.b16 %v74
    %v408 = vunpack.c.l.b16 %v75
    %v409 = vunpack.c.h.b16 %v75
    %v410 = vunpack.c.l.b16 %v76
    %v411 = vunpack.c.h.b16 %v76
    %v412 = vunpack.c.l.b16 %v77
    %v413 = vunpack.c.h.b16 %v77
    %v414 = vunpack.c.l.b16 %v78
    %v415 = vunpack.c.h.b16 %v78
    %v416 = vunpack.c.l.b16 %v79
    %v417 = vunpack.c.h.b16 %v79
    %v418 = vunpack.c.l.b16 %v80
    %v419 = vunpack.c.h.b16 %v80
    %v420 = vunpack.c.l.b16 %v81
    %v421 = vunpack.c.h.b16 %v81
    %v422 = vunpack.c.l.b16 %v82
    %v423 = vunpack.c.h.b16 %v82
    %v424 = vunpack.c.l.b16 %v83
    %v425 = vunpack.c.h.b16 %v83
    %v426 = vunpack.c.l.b16 %v84
    %v427 = vunpack.c.h.b16 %v84
    %v428 = vunpack.c.l.b16 %v85
    %v429 = vunpack.c.h.b16 %v85
    %v430 = vunpack.c.l.b16 %v86
    %v431 = vunpack.c.h.b16 %v86
    %v432 = vunpack.c.l.b16 %v87
    %v433 = vunpack.c.h.b16 %v87
    %v434 = vunpack.c.l.b16 %v88
    %v435 = vunpack.c.h.b16 %v88
    %v436 = vunpack.c.l.b16 %v89
    %v437 = vunpack.c.h.b16 %v89
    %v438 = vunpack.c.l.b16 %v90
    %v439 = vunpack.c.h.b16 %v90
    %v440 = vunpack.c.l.b16 %v91
    %v441 = vunpack.c.h.b16 %v91
    %v442 = vunpack.c.l.b16 %v92
    %v443 = vunpack.c.h.b16 %v92
    %v444 = vunpack.c.l.b16 %v93
    %v445 = vunpack.c.h.b16 %v93
    %v446 = vunpack.c.l.b16 %v94
    %v447 = vunpack.c.h.b16 %v94
    %v448 = vunpack.c.l.b16 %v95
    %v449 = vunpack.c.h.b16 %v95
    %v450 = vunpack.c.l.b16 %v96
    %v451 = vunpack.c.h.b16 %v96
    %v452 = vunpack.c.l.b16 %v97
    %v453 = vunpack.c.h.b16 %v97
    %v454 = vunpack.c.l.b16 %v98
    %v455 = vunpack.c.h.b16 %v98
    %v456 = vunpack.c.l.b16 %v99
    %v457 = vunpack.c.h.b16 %v99
    %v458 = vunpack.c.l.b16 %v100
    %v459 = vunpack.c.h.b16 %v100
    %v460 = vunpack.c.l.b16 %v101
    %v461 = vunpack.c.h.b16 %v101
    %v462 = vunpack.c.l.b16 %v102
    %v463 = vunpack.c.h.b16 %v102
    %v464 = vunpack.c.l.b16 %v103
    %v465 = vunpack.c.h.b16 %v103
    %v466 = vunpack.c.l.b16 %v104
    %v467 = vunpack.c.h.b16 %v104
    %v468 = vunpack.c.l.b16 %v105
    %v469 = vunpack.c.h.b16 %v105
    %v470 = vunpack.c.l.b16 %v106
    %v471 = vunpack.c.h.b16 %v106
    %v472 = vunpack.c.l.b16 %v107
    %v473 = vunpack.c.h.b16 %v107
    %v474 = vunpack.c.l.b16 %v108
    %v475 = vunpack.c.h.b16 %v108
    %v476 = vunpack.c.l.b16 %v109
    %v477 = vunpack.c.h.b16 %v109
    %v478 = vunpack.c.l.b16 %v110
    %v479 = vunpack.c.h.b16 %v110
    %v480 = vunpack.c.l.b16 %v111
    %v481 = vunpack.c.h.b16 %v111
    %v482 = vunpack.c.l.b16 %v112
    %v483 = vunpack.c.h.b16 %v112
    %v484 = vunpack.c.l.b16 %v113
    %v485 = vunpack.c.h.b16 %v113
    %v486 = vunpack.c.l.b16 %v114
    %v487 = vunpack.c.h.b16 %v114
    %v488 = vunpack.c.l.b16 %v115
    %v489 = vunpack.c.h.b16 %v115
    %v490 = vunpack.c.l.b16 %v116
    %v491 = vunpack.c.h.b16 %v116
    %v492 = vunpack.c.l.b16 %v117
    %v493 = vunpack.c.h.b16 %v117
    %v494 = vunpack.c.l.b16 %v118
    %v495 = vunpack.c.h.b16 %v118
    %v496 = vunpack.c.l.b16 %v119
    %v497 = vunpack.c.h.b16 %v119
    %v498 = vunpack.c.l.b16 %v120
    %v499 = vunpack.c.h.b16 %v120
    %v500 = vunpack.c.l.b16 %v121
    %v501 = vunpack.c.h.b16 %v121
    %v502 = vunpack.c.l.b16 %v122
    %v503 = vunpack.c.h.b16 %v122
    %v504 = vunpack.c.l.b16 %v123
    %v505 = vunpack.c.h.b16 %v123
    %v506 = vunpack.c.l.b16 %v124
    %v507 = vunpack.c.h.b16 %v124
    %v508 = vunpack.c.l.b16 %v125
    %v509 = vunpack.c.h.b16 %v125
    %v510 = vunpack.c.l.b16 %v126
    %v511 = vunpack.c.h.b16 %v126
    %v512 = vunpack.c.l.b16 %v127
    %v513 = vunpack.c.h.b16 %v127
    %v514 = vunpack.c.l.b16 %v128
    %v515 = vunpack.c.h.b16 %v128
    %v516 = vunpack.c.l.b16 %v129
    %v517 = vunpack.c.h.b16 %v129
    %v518 = vunpack.c.l.b16 %v130
    %v519 = vunpack.c.h.b16 %v130
    %v520 = vunpack.c.l.b16 %v131
    %v521 = vunpack.c.h.b16 %v131
    %v522 = vunpack.c.l.b16 %v132
    %v523 = vunpack.c.h.b16 %v132
    %v524 = vunpack.c.l.b16 %v133
    %v525 = vunpack.c.h.b16 %v133
    %v526 = vunpack.c.l.b16 %v134
    %v527 = vunpack.c.h.b16 %v134
    %v528 = vunpack.c.l.b16 %v135
    %v529 = vunpack.c.h.b16 %v135
    %v530 = vunpack.c.l.b16 %v136
    %v531 = vunpack.c.h.b16 %v136
    %v532 = vunpack.c.l.b16 %v137
    %v533 = vunpack.c.h.b16 %v137
    %v534 = vunpack.c.l.b16 %v138
    %v535 = vunpack.c.h.b16 %v138
    %v536 = vunpack.c.l.b16 %v139
    %v537 = vunpack.c.h.b16 %v139
    %v538 = vunpack.c.l.b16 %v140
    %v539 = vunpack.c.h.b16 %v140
    %v540 = vunpack.c.l.b16 %v141
    %v541 = vunpack.c.h.b16 %v141
    %v542 = vunpack.c.l.b16 %v142
    %v543 = vunpack.c.h.b16 %v142
    %v544 = vunpack.c.l.b16 %v143
    %v545 = vunpack.c.h.b16 %v143
    %v546 = vunpack.c.l.b16 %v144
    %v547 = vunpack.c.h.b16 %v144
    %v548 = vunpack.c.l.b16 %v145
    %v549 = vunpack.c.h.b16 %v145
    %v550 = vunpack.c.l.b16 %v146
    %v551 = vunpack.c.h.b16 %v146
    %v552 = vunpack.c.l.b16 %v147
    %v553 = vunpack.c.h.b16 %v147
    %v554 = vunpack.c.l.b16 %v148
    %v555 = vunpack.c.h.b16 %v148
    %v556 = vunpack.c.l.b16 %v149
    %v557 = vunpack.c.h.b16 %v149
    %v558 = vunpack.c.l.b16 %v150
    %v559 = vunpack.c.h.b16 %v150
    %v560 = vunpack.c.l.b16 %v151
    %v561 = vunpack.c.h.b16 %v151
    %v562 = vunpack.c.l.b16 %v152
    %v563 = vunpack.c.h.b16 %v152
    %v564 = vunpack.c.l.b16 %v153
    %v565 = vunpack.c.h.b16 %v153
    %v566 = vunpack.c.l.b16 %v154
    %v567 = vunpack.c.h.b16 %v154
    %v568 = vunpack.c.l.b16 %v155
    %v569 = vunpack.c.h.b16 %v155
    %v570 = vunpack.c.l.b16 %v156
    %v571 = vunpack.c.h.b16 %v156
    %v572 = vunpack.c.l.b16 %v157
    %v573 = vunpack.c.h.b16 %v157
    %v574 = vunpack.c.l.b16 %v158
    %v575 = vunpack.c.h.b16 %v158
    %v576 = vunpack.c.l.b16 %v159
    %v577 = vunpack.c.h.b16 %v159
    %v578 = vunpack.c.l.b16 %v160
    %v579 = vunpack.c.h.b16 %v160
    %v580 = vunpack.c.l.b16 %v161
    %v581 = vunpack.c.h.b16 %v161
    %v582 = vunpack.c.l.b16 %v162
    %v583 = vunpack.c.h.b16 %v162
    %v584 = vunpack.c.l.b16 %v163
    %v585 = vunpack.c.h.b16 %v163
    %v586 = vunpack.c.l.b16 %v164
    %v587 = vunpack.c.h.b16 %v164
    %v588 = vunpack.c.l.b16 %v165
    %v589 = vunpack.c.h.b16 %v165
    %v590 = vunpack.c.l.b16 %v166
    %v591 = vunpack.c.h.b16 %v166
    %v592 = vunpack.c.l.b16 %v167
    %v593 = vunpack.c.h.b16 %v167
    %v594 = vunpack.c.l.b16 %v168
    %v595 = vunpack.c.h.b16 %v168
    %v596 = vunpack.c.l.b16 %v169
    %v597 = vunpack.c.h.b16 %v169
    %v598 = vunpack.c.l.b16 %v170
    %v599 = vunpack.c.h.b16 %v170
    %v600 = vunpack.c.l.b16 %v171
    %v601 = vunpack.c.h.b16 %v171
    %v602 = vunpack.c.l.b16 %v172
    %v603 = vunpack.c.h.b16 %v172
    %v604 = vunpack.c.l.b16 %v173
    %v605 = vunpack.c.h.b16 %v173
    %v606 = vunpack.c.l.b16 %v174
    %v607 = vunpack.c.h.b16 %v174
    %v608 = vunpack.c.l.b16 %v175
    %v609 = vunpack.c.h.b16 %v175
    %v610 = vunpack.c.l.b16 %v176
    %v611 = vunpack.c.h.b16 %v176
    %v612 = vunpack.c.l.b16 %v177
    %v613 = vunpack.c.h.b16 %v177
    %v614 = vunpack.c.l.b16 %v178
    %v615 = vunpack.c.h.b16 %v178
    %v616 = vunpack.c.l.b16 %v179
    %v617 = vunpack.c.h.b16 %v179
    %v618 = vunpack.c.l.b16 %v180
    %v619 = vunpack.c.h.b16 %v180
    %v620 = vunpack.c.l.b16 %v181
    %v621 = vunpack.c.h.b16 %v181
    %v622 = vunpack.c.l.b16 %v182
    %v623 = vunpack.c.h.b16 %v182
    %v624 = vunpack.c.l.b16 %v183
    %v625 = vunpack.c.h.b16 %v183
    %v626 = vunpack.c.l.b16 %v184
    %v627 = vunpack.c.h.b16 %v184
    %v628 = vunpack.c.l.b16 %v185
    %v629 = vunpack.c.h.b16 %v185
    %v630 = vunpack.c.l.b16 %v186
    %v631 = vunpack.c.h.b16 %v186
    %v632 = vunpack.c.l.b16 %v187
    %v633 = vunpack.c.h.b16 %v187
    %v634 = vunpack.c.l.b16 %v188
    %v635 = vunpack.c.h.b16 %v188
    %v636 = vunpack.c.l.b16 %v189
    %v637 = vunpack.c.h.b16 %v189
    %v638 = vunpack.c.l.b16 %v190
    %v639 = vunpack.c.h.b16 %v190
    %v640 = vunpack.c.l.b16 %v191
    %v641 = vunpack.c.h.b16 %v191
    %v642 = vunpack.c.l.b16 %v192
    %v643 = vunpack.c.h.b16 %v192
    %v644 = vunpack.c.l.b16 %v193
    %v645 = vunpack.c.h.b16 %v193
    %v646 = vunpack.c.l.b16 %v194
    %v647 = vunpack.c.h.b16 %v194
    %v648 = vunpack.c.l.b16 %v195
    %v649 = vunpack.c.h.b16 %v195
    %v650 = vunpack.c.l.b16 %v196
    %v651 = vunpack.c.h.b16 %v196
    %v652 = vunpack.c.l.b16 %v197
    %v653 = vunpack.c.h.b16 %v197
    %v654 = vunpack.c.l.b16 %v198
    %v655 = vunpack.c.h.b16 %v198
    %v656 = vunpack.c.l.b16 %v199
    %v657 = vunpack.c.h.b16 %v199
    %v658 = vunpack.c.l.b16 %v200
    %v659 = vunpack.c.h.b16 %v200
    %v660 = vunpack.c.l.b16 %v201
    %v661 = vunpack.c.h.b16 %v201
    %v662 = vunpack.c.l.b16 %v202
    %v663 = vunpack.c.h.b16 %v202
    %v664 = vunpack.c.l.b16 %v203
    %v665 = vunpack.c.h.b16 %v203
    %v666 = vunpack.c.l.b16 %v204
    %v667 = vunpack.c.h.b16 %v204
    %v668 = vunpack.c.l.b16 %v205
    %v669 = vunpack.c.h.b16 %v205
    %v670 = vpack.c.b16 %v388, %v382
    %v671 = vpack.c.b16 %v389, %v383
    %v672 = vpack.c.b16 %v390, %v384
    %v673 = vpack.c.b16 %v391, %v385
    %v674 = vpack.c.b16 %v392, %v386
    %v675 = vpack.c.b16 %v393, %v387
    %v676 = vpack.c.b16 %v400, %v394
    %v677 = vpack.c.b16 %v401, %v395
    %v678 = vpack.c.b16 %v402, %v396
    %v679 = vpack.c.b16 %v403, %v397
    %v680 = vpack.c.b16 %v404, %v398
    %v681 = vpack.c.b16 %v405, %v399
    %v682 = vpack.c.b16 %v412, %v406
    %v683 = vpack.c.b16 %v413, %v407
    %v684 = vpack.c.b16 %v414, %v408
    %v685 = vpack.c.b16 %v415, %v409
    %v686 = vpack.c.b16 %v416, %v410
    %v687 = vpack.c.b16 %v417, %v411
    %v688 = vpack.c.b16 %v424, %v418
    %v689 = vpack.c.b16 %v425, %v419
    %v690 = vpack.c.b16 %v426, %v420
    %v691 = vpack.c.b16 %v427, %v421
    %v692 = vpack.c.b16 %v428, %v422
    %v693 = vpack.c.b16 %v429, %v423
    %v694 = vpack.c.b16 %v436, %v430
    %v695 = vpack.c.b16 %v437, %v431
    %v696 = vpack.c.b16 %v438, %v432
    %v697 = vpack.c.b16 %v439, %v433
    %v698 = vpack.c.b16 %v440, %v434
    %v699 = vpack.c.b16 %v441, %v435
    %v700 = vpack.c.b16 %v448, %v442
    %v701 = vpack.c.b16 %v449, %v443
    %v702 = vpack.c.b16 %v450, %v444
    %v703 = vpack.c.b16 %v451, %v445
    %v704 = vpack.c.b16 %v452, %v446
    %v705 = vpack.c.b16 %v453, %v447
    %v706 = vpack.c.b16 %v460, %v454
    %v707 = vpack.c.b16 %v461, %v455
    %v708 = vpack.c.b16 %v462, %v456
    %v709 = vpack.c.b16 %v463, %v457
    %v710 = vpack.c.b16 %v464, %v458
    %v711 = vpack.c.b16 %v465, %v459
    %v712 = vpack.c.b16 %v472, %v466
    %v713 = vpack.c.b16 %v473, %v467
    %v714 = vpack.c.b16 %v474, %v468
    %v715 = vpack.c.b16 %v475, %v469
    %v716 = vpack.c.b16 %v476, %v470
    %v717 = vpack.c.b16 %v477, %v471
    %v718 = vpack.c.b16 %v484, %v478
    %v719 = vpack.c.b16 %v485, %v479
    %v720 = vpack.c.b16 %v486, %v480
    %v721 = vpack.c.b16 %v487, %v481
    %v722 = vpack.c.b16 %v488, %v482
    %v723 = vpack.c.b16 %v489, %v483
    %v724 = vpack.c.b16 %v496, %v490
    %v725 = vpack.c.b16 %v497, %v491
    %v726 = vpack.c.b16 %v498, %v492
    %v727 = vpack.c.b16 %v499, %v493
    %v728 = vpack.c.b16 %v500, %v494
    %v729 = vpack.c.b16 %v501, %v495
    %v730 = vpack.c.b16 %v508, %v502
    %v731 = vpack.c.b16 %v509, %v503
    %v732 = vpack.c.b16 %v510, %v504
    %v733 = vpack.c.b16 %v511, %v505
    %v734 = vpack.c.b16 %v512, %v506
    %v735 = vpack.c.b16 %v513, %v507
    %v736 = vpack.c.b16 %v520, %v514
    %v737 = vpack.c.b16 %v521, %v515
    %v738 = vpack.c.b16 %v522, %v516
    %v739 = vpack.c.b16 %v523, %v517
    %v740 = vpack.c.b16 %v524, %v518
    %v741 = vpack.c.b16 %v525, %v519
    %v742 = vpack.c.b16 %v532, %v526
    %v743 = vpack.c.b16 %v533, %v527
    %v744 = vpack.c.b16 %v534, %v528
    %v745 = vpack.c.b16 %v535, %v529
    %v746 = vpack.c.b16 %v536, %v530
    %v747 = vpack.c.b16 %v537, %v531
    %v748 = vpack.c.b16 %v544, %v538
    %v749 = vpack.c.b16 %v545, %v539
    %v750 = vpack.c.b16 %v546, %v540
    %v751 = vpack.c.b16 %v547, %v541
    %v752 = vpack.c.b16 %v548, %v542
    %v753 = vpack.c.b16 %v549, %v543
    %v754 = vpack.c.b16 %v556, %v550
    %v755 = vpack.c.b16 %v557, %v551
    %v756 = vpack.c.b16 %v558, %v552
    %v757 = vpack.c.b16 %v559, %v553
    %v758 = vpack.c.b16 %v560, %v554
    %v759 = vpack.c.b16 %v561, %v555
    %v760 = vpack.c.b16 %v568, %v562
    %v761 = vpack.c.b16 %v569, %v563
    %v762 = vpack.c.b16 %v570, %v564
    %v763 = vpack.c.b16 %v571, %v565
    %v764 = vpack.c.b16 %v572, %v566
    %v765 = vpack.c.b16 %v573, %v567
    %v766 = vpack.c.b16 %v580, %v574
    %v767 = vpack.c.b16 %v581, %v575
    %v768 = vpack.c.b16 %v582, %v576
    %v769 = vpack.c.b16 %v583, %v577
    %v770 = vpack.c.b16 %v584, %v578
    %v771 = vpack.c.b16 %v585, %v579
    %v772 = vpack.c.b16 %v592, %v586
    %v773 = vpack.c.b16 %v593, %v587
    %v774 = vpack.c.b16 %v594, %v588
    %v775 = vpack.c.b16 %v595, %v589
    %v776 = vpack.c.b16 %v596, %v590
    %v777 = vpack.c.b16 %v597, %v591
    %v778 = vpack.c.b16 %v604, %v598
    %v779 = vpack.c.b16 %v605, %v599
    %v780 = vpack.c.b16 %v606, %v600
    %v781 = vpack.c.b16 %v607, %v601
    %v782 = vpack.c.b16 %v608, %v602
    %v783 = vpack.c.b16 %v609, %v603
    %v784 = vpack.c.b16 %v616, %v610
    %v785 = vpack.c.b16 %v617, %v611
    %v786 = vpack.c.b16 %v618, %v612
    %v787 = vpack.c.b16 %v619, %v613
    %v788 = vpack.c.b16 %v620, %v614
    %v789 = vpack.c.b16 %v621, %v615
    %v790 = vpack.c.b16 %v628, %v622
    %v791 = vpack.c.b16 %v629, %v623
    %v792 = vpack.c.b16 %v630, %v624
    %v793 = vpack.c.b16 %v631, %v625
    %v794 = vpack.c.b16 %v632, %v626
    %v795 = vpack.c.b16 %v633, %v627
    %v796 = vpack.c.b16 %v640, %v634
    %v797 = vpack.c.b16 %v641, %v635
    %v798 = vpack.c.b16 %v642, %v636
    %v799 = vpack.c.b16 %v643, %v637
    %v800 = vpack.c.b16 %v644, %v638
    %v801 = vpack.c.b16 %v645, %v639
    %v802 = vpack.c.b16 %v652, %v646
    %v803 = vpack.c.b16 %v653, %v647
    %v804 = vpack.c.b16 %v654, %v648
    %v805 = vpack.c.b16 %v655, %v649
    %v806 = vpack.c.b16 %v656, %v650
    %v807 = vpack.c.b16 %v657, %v651
    %v808 = vpack.c.b16 %v664, %v658
    %v809 = vpack.c.b16 %v665, %v659
    %v810 = vpack.c.b16 %v666, %v660
    %v811 = vpack.c.b16 %v667, %v661
    %v812 = vpack.c.b16 %v668, %v662
    %v813 = vpack.c.b16 %v669, %v663
    %958 = vmatprep.subr.bf16.mxu0 %v671
    %959 = vmatpush1.bf16.msra.mxu0 %v670
    %960 = vmatprep.subr.bf16.mxu0 %v677
    %961 = vmatpush1.bf16.msra.mxu0 %v676
    %962 = vmatprep.subr.bf16.mxu0 %v683
    %963 = vmatpush1.bf16.msra.mxu0 %v682
    %964 = vmatprep.subr.bf16.mxu0 %v689
    %965 = vmatpush1.bf16.msra.mxu0 %v688
    %966 = vmatprep.subr.bf16.mxu0 %v695
    %967 = vmatpush1.bf16.msra.mxu0 %v694
    %968 = vmatprep.subr.bf16.mxu0 %v701
    %969 = vmatpush1.bf16.msra.mxu0 %v700
    %970 = vmatprep.subr.bf16.mxu0 %v707
    %971 = vmatpush1.bf16.msra.mxu0 %v706
    %972 = vmatprep.subr.bf16.mxu0 %v713
    %973 = vmatpush1.bf16.msra.mxu0 %v712
    %974 = vmatprep.subr.bf16.mxu0 %v719
    %975 = vmatpush1.bf16.msra.mxu0 %v718
    %976 = vmatprep.subr.bf16.mxu0 %v725
    %977 = vmatpush1.bf16.msra.mxu0 %v724
    %978 = vmatprep.subr.bf16.mxu0 %v731
    %979 = vmatpush1.bf16.msra.mxu0 %v730
    %980 = vmatprep.subr.bf16.mxu0 %v737
    %981 = vmatpush1.bf16.msra.mxu0 %v736
    %982 = vmatprep.subr.bf16.mxu0 %v743
    %983 = vmatpush1.bf16.msra.mxu0 %v742
    %984 = vmatprep.subr.bf16.mxu0 %v749
    %985 = vmatpush1.bf16.msra.mxu0 %v748
    %986 = vmatprep.subr.bf16.mxu0 %v755
    %987 = vmatpush1.bf16.msra.mxu0 %v754
    %988 = vmatprep.subr.bf16.mxu0 %v761
    %989 = vmatpush1.bf16.msra.mxu0 %v760
    %990 = vmatprep.mubr.bf16.mxu0 %v57
    %991 = vmatmul.mubr.bf16.gmra.mrb[0].mxu0 %v56
    %v992 = vpop.f32.mrb[0].mxu0
    %v993 = vadd.f32 %v211, %v992
    %v994 = vpop.f32.mrb[0].mxu0
    %v995 = vadd.f32 %v215, %v994
    %v996 = vpop.f32.mrb[0].mxu0
    %v997 = vadd.f32 %v211, %v996
    %v998 = vpop.f32.mrb[0].mxu0
    %v999 = vadd.f32 %v215, %v998
    %1000 = vmatprep.mubr.bf16.mxu0 %v60
    %1001 = vmatmul.mubr.bf16.gmra.mrb[0].mxu0 %v59
    %v1002 = vpop.f32.mrb[0].mxu0
    %v1003 = vadd.f32 %v211, %v1002
    %v1004 = vpop.f32.mrb[0].mxu0
    %v1005 = vadd.f32 %v215, %v1004
    %v1006 = vpop.f32.mrb[0].mxu0
    %v1007 = vadd.f32 %v211, %v1006
    %v1008 = vpop.f32.mrb[0].mxu0
    %v1009 = vadd.f32 %v215, %v1008
    %1010 = vdwg.mxu0
    %1011 = vmatprep.subr.bf16.mxu0 %v767
    %1012 = vmatpush1.bf16.msra.mxu0 %v766
    %1013 = vmatprep.subr.bf16.mxu0 %v773
    %1014 = vmatpush1.bf16.msra.mxu0 %v772
    %1015 = vmatprep.subr.bf16.mxu0 %v779
    %1016 = vmatpush1.bf16.msra.mxu0 %v778
    %1017 = vmatprep.subr.bf16.mxu0 %v785
    %1018 = vmatpush1.bf16.msra.mxu0 %v784
    %1019 = vmatprep.subr.bf16.mxu0 %v791
    %1020 = vmatpush1.bf16.msra.mxu0 %v790
    %1021 = vmatprep.subr.bf16.mxu0 %v797
    %1022 = vmatpush1.bf16.msra.mxu0 %v796
    %1023 = vmatprep.subr.bf16.mxu0 %v803
    %1024 = vmatpush1.bf16.msra.mxu0 %v802
    %1025 = vmatprep.subr.bf16.mxu0 %v809
    %1026 = vmatpush1.bf16.msra.mxu0 %v808
    %1027 = vmatprep.subr.bf16.mxu0 0
    %1028 = vmatpush1.bf16.msra.mxu0 0
    %1029 = vmatprep.subr.bf16.mxu0 0
    %1030 = vmatpush1.bf16.msra.mxu0 0
    %1031 = vmatprep.subr.bf16.mxu0 0
    %1032 = vmatpush1.bf16.msra.mxu0 0
    %1033 = vmatprep.subr.bf16.mxu0 0
    %1034 = vmatpush1.bf16.msra.mxu0 0
    %1035 = vmatprep.subr.bf16.mxu0 0
    %1036 = vmatpush1.bf16.msra.mxu0 0
    %1037 = vmatprep.subr.bf16.mxu0 0
    %1038 = vmatpush1.bf16.msra.mxu0 0
    %1039 = vmatprep.subr.bf16.mxu0 0
    %1040 = vmatpush1.bf16.msra.mxu0 0
    %1041 = vmatprep.subr.bf16.mxu0 0
    %1042 = vmatpush1.bf16.msra.mxu0 0
    %1043 = vmatprep.mubr.bf16.mxu0 0
    %1044 = vmatmul.mubr.bf16.gmra.mrb[0].mxu0 %v58
    %v1045 = vpop.f32.mrb[0].mxu0
    %v1046 = vadd.f32 %v993, %v1045
    %v1047 = vpop.f32.mrb[0].mxu0
    %v1048 = vadd.f32 %v995, %v1047
    %v1049 = vpop.f32.mrb[0].mxu0
    %v1050 = vadd.f32 %v997, %v1049
    %v1051 = vpop.f32.mrb[0].mxu0
    %v1052 = vadd.f32 %v999, %v1051
    %1053 = vmatprep.mubr.bf16.mxu0 0
    %1054 = vmatmul.mubr.bf16.gmra.mrb[0].mxu0 %v61
    %v1055 = vpop.f32.mrb[0].mxu0
    %v1056 = vadd.f32 %v1003, %v1055
    %v1057 = vpop.f32.mrb[0].mxu0
    %v1058 = vadd.f32 %v1005, %v1057
    %v1059 = vpop.f32.mrb[0].mxu0
    %v1060 = vadd.f32 %v1007, %v1059
    %v1061 = vpop.f32.mrb[0].mxu0
    %v1062 = vadd.f32 %v1009, %v1061
    %1063 = vdwg.mxu0
    %1064 = vmatprep.subr.bf16.mxu0 %v673
    %1065 = vmatpush1.bf16.msra.mxu0 %v672
    %1066 = vmatprep.subr.bf16.mxu0 %v679
    %1067 = vmatpush1.bf16.msra.mxu0 %v678
    %1068 = vmatprep.subr.bf16.mxu0 %v685
    %1069 = vmatpush1.bf16.msra.mxu0 %v684
    %1070 = vmatprep.subr.bf16.mxu0 %v691
    %1071 = vmatpush1.bf16.msra.mxu0 %v690
    %1072 = vmatprep.subr.bf16.mxu0 %v697
    %1073 = vmatpush1.bf16.msra.mxu0 %v696
    %1074 = vmatprep.subr.bf16.mxu0 %v703
    %1075 = vmatpush1.bf16.msra.mxu0 %v702
    %1076 = vmatprep.subr.bf16.mxu0 %v709
    %1077 = vmatpush1.bf16.msra.mxu0 %v708
    %1078 = vmatprep.subr.bf16.mxu0 %v715
    %1079 = vmatpush1.bf16.msra.mxu0 %v714
    %1080 = vmatprep.subr.bf16.mxu0 %v721
    %1081 = vmatpush1.bf16.msra.mxu0 %v720
    %1082 = vmatprep.subr.bf16.mxu0 %v727
    %1083 = vmatpush1.bf16.msra.mxu0 %v726
    %1084 = vmatprep.subr.bf16.mxu0 %v733
    %1085 = vmatpush1.bf16.msra.mxu0 %v732
    %1086 = vmatprep.subr.bf16.mxu0 %v739
    %1087 = vmatpush1.bf16.msra.mxu0 %v738
    %1088 = vmatprep.subr.bf16.mxu0 %v745
    %1089 = vmatpush1.bf16.msra.mxu0 %v744
    %1090 = vmatprep.subr.bf16.mxu0 %v751
    %1091 = vmatpush1.bf16.msra.mxu0 %v750
    %1092 = vmatprep.subr.bf16.mxu0 %v757
    %1093 = vmatpush1.bf16.msra.mxu0 %v756
    %1094 = vmatprep.subr.bf16.mxu0 %v763
    %1095 = vmatpush1.bf16.msra.mxu0 %v762
    %1096 = vmatprep.mubr.bf16.mxu0 %v57
    %1097 = vmatmul.mubr.bf16.gmra.mrb[0].mxu0 %v56
    %v1098 = vpop.f32.mrb[0].mxu0
    %v1099 = vadd.f32 %v219, %v1098
    %v1100 = vpop.f32.mrb[0].mxu0
    %v1101 = vadd.f32 %v223, %v1100
    %v1102 = vpop.f32.mrb[0].mxu0
    %v1103 = vadd.f32 %v219, %v1102
    %v1104 = vpop.f32.mrb[0].mxu0
    %v1105 = vadd.f32 %v223, %v1104
    %1106 = vmatprep.mubr.bf16.mxu0 %v60
    %1107 = vmatmul.mubr.bf16.gmra.mrb[0].mxu0 %v59
    %v1108 = vpop.f32.mrb[0].mxu0
    %v1109 = vadd.f32 %v219, %v1108
    %v1110 = vpop.f32.mrb[0].mxu0
    %v1111 = vadd.f32 %v223, %v1110
    %v1112 = vpop.f32.mrb[0].mxu0
    %v1113 = vadd.f32 %v219, %v1112
    %v1114 = vpop.f32.mrb[0].mxu0
    %v1115 = vadd.f32 %v223, %v1114
    %1116 = vdwg.mxu0
    %1117 = vmatprep.subr.bf16.mxu0 %v769
    %1118 = vmatpush1.bf16.msra.mxu0 %v768
    %1119 = vmatprep.subr.bf16.mxu0 %v775
    %1120 = vmatpush1.bf16.msra.mxu0 %v774
    %1121 = vmatprep.subr.bf16.mxu0 %v781
    %1122 = vmatpush1.bf16.msra.mxu0 %v780
    %1123 = vmatprep.subr.bf16.mxu0 %v787
    %1124 = vmatpush1.bf16.msra.mxu0 %v786
    %1125 = vmatprep.subr.bf16.mxu0 %v793
    %1126 = vmatpush1.bf16.msra.mxu0 %v792
    %1127 = vmatprep.subr.bf16.mxu0 %v799
    %1128 = vmatpush1.bf16.msra.mxu0 %v798
    %1129 = vmatprep.subr.bf16.mxu0 %v805
    %1130 = vmatpush1.bf16.msra.mxu0 %v804
    %1131 = vmatprep.subr.bf16.mxu0 %v811
    %1132 = vmatpush1.bf16.msra.mxu0 %v810
    %1133 = vmatprep.subr.bf16.mxu0 0
    %1134 = vmatpush1.bf16.msra.mxu0 0
    %1135 = vmatprep.subr.bf16.mxu0 0
    %1136 = vmatpush1.bf16.msra.mxu0 0
    %1137 = vmatprep.subr.bf16.mxu0 0
    %1138 = vmatpush1.bf16.msra.mxu0 0
    %1139 = vmatprep.subr.bf16.mxu0 0
    %1140 = vmatpush1.bf16.msra.mxu0 0
    %1141 = vmatprep.subr.bf16.mxu0 0
    %1142 = vmatpush1.bf16.msra.mxu0 0
    %1143 = vmatprep.subr.bf16.mxu0 0
    %1144 = vmatpush1.bf16.msra.mxu0 0
    %1145 = vmatprep.subr.bf16.mxu0 0
    %1146 = vmatpush1.bf16.msra.mxu0 0
    %1147 = vmatprep.subr.bf16.mxu0 0
    %1148 = vmatpush1.bf16.msra.mxu0 0
    %1149 = vmatprep.mubr.bf16.mxu0 0
    %1150 = vmatmul.mubr.bf16.gmra.mrb[0].mxu0 %v58
    %v1151 = vpop.f32.mrb[0].mxu0
    %v1152 = vadd.f32 %v1099, %v1151
    %v1153 = vpop.f32.mrb[0].mxu0
    %v1154 = vadd.f32 %v1101, %v1153
    %v1155 = vpop.f32.mrb[0].mxu0
    %v1156 = vadd.f32 %v1103, %v1155
    %v1157 = vpop.f32.mrb[0].mxu0
    %v1158 = vadd.f32 %v1105, %v1157
    %1159 = vmatprep.mubr.bf16.mxu0 0
    %1160 = vmatmul.mubr.bf16.gmra.mrb[0].mxu0 %v61
    %v1161 = vpop.f32.mrb[0].mxu0
    %v1162 = vadd.f32 %v1109, %v1161
    %v1163 = vpop.f32.mrb[0].mxu0
    %v1164 = vadd.f32 %v1111, %v1163
    %v1165 = vpop.f32.mrb[0].mxu0
    %v1166 = vadd.f32 %v1113, %v1165
    %v1167 = vpop.f32.mrb[0].mxu0
    %v1168 = vadd.f32 %v1115, %v1167
    %1169 = vdwg.mxu0
    %1170 = vmatprep.subr.bf16.mxu0 %v675
    %1171 = vmatpush1.bf16.msra.mxu0 %v674
    %1172 = vmatprep.subr.bf16.mxu0 %v681
    %1173 = vmatpush1.bf16.msra.mxu0 %v680
    %1174 = vmatprep.subr.bf16.mxu0 %v687
    %1175 = vmatpush1.bf16.msra.mxu0 %v686
    %1176 = vmatprep.subr.bf16.mxu0 %v693
    %1177 = vmatpush1.bf16.msra.mxu0 %v692
    %1178 = vmatprep.subr.bf16.mxu0 %v699
    %1179 = vmatpush1.bf16.msra.mxu0 %v698
    %1180 = vmatprep.subr.bf16.mxu0 %v705
    %1181 = vmatpush1.bf16.msra.mxu0 %v704
    %1182 = vmatprep.subr.bf16.mxu0 %v711
    %1183 = vmatpush1.bf16.msra.mxu0 %v710
    %1184 = vmatprep.subr.bf16.mxu0 %v717
    %1185 = vmatpush1.bf16.msra.mxu0 %v716
    %1186 = vmatprep.subr.bf16.mxu0 %v723
    %1187 = vmatpush1.bf16.msra.mxu0 %v722
    %1188 = vmatprep.subr.bf16.mxu0 %v729
    %1189 = vmatpush1.bf16.msra.mxu0 %v728
    %1190 = vmatprep.subr.bf16.mxu0 %v735
    %1191 = vmatpush1.bf16.msra.mxu0 %v734
    %1192 = vmatprep.subr.bf16.mxu0 %v741
    %1193 = vmatpush1.bf16.msra.mxu0 %v740
    %1194 = vmatprep.subr.bf16.mxu0 %v747
    %1195 = vmatpush1.bf16.msra.mxu0 %v746
    %1196 = vmatprep.subr.bf16.mxu0 %v753
    %1197 = vmatpush1.bf16.msra.mxu0 %v752
    %1198 = vmatprep.subr.bf16.mxu0 %v759
    %1199 = vmatpush1.bf16.msra.mxu0 %v758
    %1200 = vmatprep.subr.bf16.mxu0 %v765
    %1201 = vmatpush1.bf16.msra.mxu0 %v764
    %1202 = vmatprep.mubr.bf16.mxu0 %v57
    %1203 = vmatmul.mubr.bf16.gmra.mrb[0].mxu0 %v56
    %v1204 = vpop.f32.mrb[0].mxu0
    %v1205 = vadd.f32 %v227, %v1204
    %v1206 = vpop.f32.mrb[0].mxu0
    %v1207 = vadd.f32 %v231, %v1206
    %v1208 = vpop.f32.mrb[0].mxu0
    %v1209 = vadd.f32 %v227, %v1208
    %v1210 = vpop.f32.mrb[0].mxu0
    %v1211 = vadd.f32 %v231, %v1210
    %1212 = vmatprep.mubr.bf16.mxu0 %v60
    %1213 = vmatmul.mubr.bf16.gmra.mrb[0].mxu0 %v59
    %v1214 = vpop.f32.mrb[0].mxu0
    %v1215 = vadd.f32 %v227, %v1214
    %v1216 = vpop.f32.mrb[0].mxu0
    %v1217 = vadd.f32 %v231, %v1216
    %v1218 = vpop.f32.mrb[0].mxu0
    %v1219 = vadd.f32 %v227, %v1218
    %v1220 = vpop.f32.mrb[0].mxu0
    %v1221 = vadd.f32 %v231, %v1220
    %1222 = vdwg.mxu0
    %1223 = vmatprep.subr.bf16.mxu0 %v771
    %1224 = vmatpush1.bf16.msra.mxu0 %v770
    %1225 = vmatprep.subr.bf16.mxu0 %v777
    %1226 = vmatpush1.bf16.msra.mxu0 %v776
    %1227 = vmatprep.subr.bf16.mxu0 %v783
    %1228 = vmatpush1.bf16.msra.mxu0 %v782
    %1229 = vmatprep.subr.bf16.mxu0 %v789
    %1230 = vmatpush1.bf16.msra.mxu0 %v788
    %1231 = vmatprep.subr.bf16.mxu0 %v795
    %1232 = vmatpush1.bf16.msra.mxu0 %v794
    %1233 = vmatprep.subr.bf16.mxu0 %v801
    %1234 = vmatpush1.bf16.msra.mxu0 %v800
    %1235 = vmatprep.subr.bf16.mxu0 %v807
    %1236 = vmatpush1.bf16.msra.mxu0 %v806
    %1237 = vmatprep.subr.bf16.mxu0 %v813
    %1238 = vmatpush1.bf16.msra.mxu0 %v812
    %1239 = vmatprep.subr.bf16.mxu0 0
    %1240 = vmatpush1.bf16.msra.mxu0 0
    %1241 = vmatprep.subr.bf16.mxu0 0
    %1242 = vmatpush1.bf16.msra.mxu0 0
    %1243 = vmatprep.subr.bf16.mxu0 0
    %1244 = vmatpush1.bf16.msra.mxu0 0
    %1245 = vmatprep.subr.bf16.mxu0 0
    %1246 = vmatpush1.bf16.msra.mxu0 0
    %1247 = vmatprep.subr.bf16.mxu0 0
    %1248 = vmatpush1.bf16.msra.mxu0 0
    %1249 = vmatprep.subr.bf16.mxu0 0
    %1250 = vmatpush1.bf16.msra.mxu0 0
    %1251 = vmatprep.subr.bf16.mxu0 0
    %1252 = vmatpush1.bf16.msra.mxu0 0
    %1253 = vmatprep.subr.bf16.mxu0 0
    %1254 = vmatpush1.bf16.msra.mxu0 0
    %1255 = vmatprep.mubr.bf16.mxu0 0
    %1256 = vmatmul.mubr.bf16.gmra.mrb[0].mxu0 %v58
    %v1257 = vpop.f32.mrb[0].mxu0
    %v1258 = vadd.f32 %v1205, %v1257
    %v1259 = vpop.f32.mrb[0].mxu0
    %v1260 = vadd.f32 %v1207, %v1259
    %v1261 = vpop.f32.mrb[0].mxu0
    %v1262 = vadd.f32 %v1209, %v1261
    %v1263 = vpop.f32.mrb[0].mxu0
    %v1264 = vadd.f32 %v1211, %v1263
    %1265 = vmatprep.mubr.bf16.mxu0 0
    %1266 = vmatmul.mubr.bf16.gmra.mrb[0].mxu0 %v61
    %v1267 = vpop.f32.mrb[0].mxu0
    %v1268 = vadd.f32 %v1215, %v1267
    %v1269 = vpop.f32.mrb[0].mxu0
    %v1270 = vadd.f32 %v1217, %v1269
    %v1271 = vpop.f32.mrb[0].mxu0
    %v1272 = vadd.f32 %v1219, %v1271
    %v1273 = vpop.f32.mrb[0].mxu0
    %v1274 = vadd.f32 %v1221, %v1273
    %1275 = vdwg.mxu0
    %1276 = vst [vmem:[#allocation7] sm:$0xff] %v1046
    %1277 = vst [vmem:[#allocation7 + $0x8] sm:$0xff] %v1048
    %1278 = vst [vmem:[#allocation7 + $0x10] sm:$0xff] %v1152
    %1279 = vst [vmem:[#allocation7 + $0x18] sm:$0xff] %v1154
    %1280 = vst [vmem:[#allocation7 + $0x20] sm:$0xff] %v1258
    %1281 = vst [vmem:[#allocation7 + $0x28] sm:$0xff] %v1260
    %1282 = vst [vmem:[#allocation7 + $0x30] sm:$0xff] %v1050
    %1283 = vst [vmem:[#allocation7 + $0x38] sm:$0xff] %v1052
    %1284 = vst [vmem:[#allocation7 + $0x40] sm:$0xff] %v1156
    %1285 = vst [vmem:[#allocation7 + $0x48] sm:$0xff] %v1158
    %1286 = vst [vmem:[#allocation7 + $0x50] sm:$0xff] %v1262
    %1287 = vst [vmem:[#allocation7 + $0x58] sm:$0xff] %v1264
    %1288 = vst [vmem:[#allocation7 + $0x60] sm:$0xff] %v1056
    %1289 = vst [vmem:[#allocation7 + $0x68] sm:$0xff] %v1058
    %1290 = vst [vmem:[#allocation7 + $0x70] sm:$0xff] %v1162
    %1291 = vst [vmem:[#allocation7 + $0x78] sm:$0xff] %v1164
    %1292 = vst [vmem:[#allocation7 + $0x80] sm:$0xff] %v1268
    %1293 = vst [vmem:[#allocation7 + $0x88] sm:$0xff] %v1270
    %1294 = vst [vmem:[#allocation7 + $0x90] sm:$0xff] %v1060
    %1295 = vst [vmem:[#allocation7 + $0x98] sm:$0xff] %v1062
    %1296 = vst [vmem:[#allocation7 + $0xa0] sm:$0xff] %v1166
    %1297 = vst [vmem:[#allocation7 + $0xa8] sm:$0xff] %v1168
    %1298 = vst [vmem:[#allocation7 + $0xb0] sm:$0xff] %v1272
    %1299 = vst [vmem:[#allocation7 + $0xb8] sm:$0xff] %v1274
    // Predicated region
    $region22: #{tpu_custom_call.1} parent=1 // pred_check
      _
    $region23: #{tpu_custom_call.1} parent=1 // pred_check_branch
      %1301 = sbr.rel (0) target = $region25
    $region24: #{tpu_custom_call.1} parent=1 // pred_region
      %s1303 = ssub.s32 3072, 3072
      %1304 = vsyncadd [#allocation4], %s1303
      %s1305 = sshll.u32 [#allocation7], 4
      %s1306 = int_to_ptr.vmem [resolvable:$true] %s1305
      %1311 = dma.vmem_to_hbm [thread:$0]  %s1306, 3072, %s3, [#allocation4], 768, 768, 48
    $region25: #{tpu_custom_call.1} parent=1 // pred_fallthru
      _
    // Predicated region
    $region26: #{tpu_custom_call.1} parent=1 // pred_check
      _
    $region27: #{tpu_custom_call.1} parent=1 // pred_check_branch
      %1313 = sbr.rel (0) target = $region29
    $region28: #{tpu_custom_call.1} parent=1 // pred_region
      %1314 = dma.done [#allocation4], 3072
    $region29: #{tpu_custom_call.1} parent=1 // pred_fallthru
      _
    %1315 = vsyncpa [#allocation3], 1
    %1316 = vsyncpa [#allocation6], 1
    %1317 = vsyncpa [#allocation4], 1

</llo_original>
